<compile_context>
chip_gen: v7x
topology: tpu7x:2x2x1
jax: 0.10.0
libtpu: 0.0.40
codegen_flags: <defaults>
</compile_context>

<pallas_src>
import jax
import jax.numpy as jnp
from jax.experimental import pallas as pl
from jax.experimental.pallas import tpu as pltpu

_LANES = 128
_SOFTPLUS_THRESHOLD = 20.0  # PyTorch F.softplus default threshold


def _mish_kernel(x_ref, o_ref):
    xf = x_ref[...].astype(jnp.float32)
    # mish(x) = x * tanh(softplus(x)).  With e = exp(x):
    #   tanh(log1p(e)) = ((1 + e)^2 - 1) / ((1 + e)^2 + 1)
    # Clamp the exp argument; for x > threshold mish(x) == x (selected below),
    # so the clamp never changes a selected value and exp never overflows.
    e = jnp.exp(jnp.minimum(xf, _SOFTPLUS_THRESHOLD))
    p = 1.0 + e
    q = p * p
    d = q + 1.0
    r = pl.reciprocal(d, approx=True)
    r = r * (2.0 - d * r)          # one Newton step (VPU, cheap) -> ~f32-accurate 1/d
    t = (q - 1.0) * r
    out = jnp.where(xf > _SOFTPLUS_THRESHOLD, xf, xf * t)
    o_ref[...] = out.astype(o_ref.dtype)


def mish(x, *, tile_rows=2048, min_grid_steps=8):
    """Apply Mish elementwise to an array of any shape (NCDHW expected)."""
    orig_shape = x.shape
    orig_dtype = x.dtype
    n = x.size

    rows = pl.cdiv(n, _LANES)
    padded = rows * _LANES

    flat = jnp.ravel(x)
    needs_pad = padded != n
    if needs_pad:
        # Only the ragged tail (< 128 elements) is padded; 128-divisible sizes
        # (all the U-Net feature maps) take the reshape-only fast path.
        flat = jnp.pad(flat, (0, padded - n))
    x2d = flat.reshape(rows, _LANES)

    # Block rows: big enough to amortize per-grid-step overhead (up to
    # 2048 x 128 f32 = 1 MiB), small enough that double-buffered in+out fits
    # every generation's VMEM with huge headroom, and sized so the grid keeps
    # >= min_grid_steps steps when possible (v7x has 2 TensorCores).
    if rows <= 8:
        bt = rows                                        # full-extent block (always legal)
    else:
        bt = max(8, min(tile_rows, pl.cdiv(rows, min_grid_steps)))
        bt = ((bt + 7) // 8) * 8                         # keep (8, 128) alignment

    grid = (pl.cdiv(rows, bt),)

    itemsize = jnp.dtype(orig_dtype).itemsize
    cost = pl.CostEstimate(
        flops=10 * n,                  # handful of VPU ops per element
        transcendentals=2 * n,         # exp + reciprocal per element
        bytes_accessed=2 * n * itemsize,
    )

    out2d = pl.pallas_call(
        _mish_kernel,
        out_shape=jax.ShapeDtypeStruct((rows, _LANES), orig_dtype),
        grid_spec=pltpu.PrefetchScalarGridSpec(
            num_scalar_prefetch=0,
            grid=grid,
            in_specs=[pl.BlockSpec((bt, _LANES), lambda i: (i, 0))],
            out_specs=pl.BlockSpec((bt, _LANES), lambda i: (i, 0)),
        ),
        compiler_params=pltpu.CompilerParams(
            dimension_semantics=("parallel",),
        ),
        cost_estimate=cost,
    )(x2d)

    out_flat = out2d.reshape(-1)
    if needs_pad:
        out_flat = out_flat[:n]
    return out_flat.reshape(orig_shape)


def _mish_ref(x):
    xf = x.astype(jnp.float32)
    sp = jnp.maximum(xf, 0.0) + jnp.log1p(jnp.exp(-jnp.abs(xf)))
    return (xf * jnp.tanh(sp)).astype(x.dtype)


if __name__ == "__main__":
    key = jax.random.PRNGKey(0)

    # NCDHW feature map consistent with a 3D U-Net block (size % 128 == 0 fast path).
    x = jax.random.normal(key, (2, 4, 8, 16, 16), dtype=jnp.float32) * 3.0
    y = jax.block_until_ready(mish(x))
    y_ref = _mish_ref(x)
    assert y.shape == x.shape and y.dtype == x.dtype
    assert float(jnp.max(jnp.abs(y - y_ref))) < 2e-3

    # Ragged size: exercises the tail-pad path and a tiny single-block grid.
    x2 = jax.random.normal(jax.random.PRNGKey(1), (3, 5, 7), dtype=jnp.float32) * 5.0
    y2 = jax.block_until_ready(mish(x2))
    y2_ref = _mish_ref(x2)
    assert y2.shape == x2.shape and y2.dtype == x2.dtype
    assert float(jnp.max(jnp.abs(y2 - y2_ref))) < 2e-3

    print("KERNEL_OK")
</pallas_src>

<mosaic_0001>
module attributes {stable_mosaic.version = 11 : i64} {
  func.func @_mish_kernel(%arg0: i32, %arg1: memref<16x128xf32, #tpu.memory_space<vmem>>, %arg2: memref<16x128xf32, #tpu.memory_space<vmem>>) attributes {dimension_semantics = [#tpu.dimension_semantics<parallel>], iteration_bounds = array<i64: 8>, scalar_prefetch = 0 : i64, scratch_operands = 0 : i64, tpu.core_type = #tpu.core_type<tc>, window_params = [{transform_indices = @transform_0, window_bounds = array<i64: 16, 128>}, {transform_indices = @transform_1, window_bounds = array<i64: 16, 128>}]} {
    %c0 = arith.constant 0 : index
    %c0_0 = arith.constant 0 : index
    %0 = vector.load %arg1[%c0, %c0_0] : memref<16x128xf32, #tpu.memory_space<vmem>>, vector<16x128xf32>
    %cst = arith.constant 2.000000e+01 : f32
    %1 = vector.broadcast %cst : f32 to vector<16x128xf32>
    %2 = arith.minimumf %0, %1 : vector<16x128xf32>
    %3 = math.exp %2 : vector<16x128xf32>
    %cst_1 = arith.constant 1.000000e+00 : f32
    %4 = vector.broadcast %cst_1 : f32 to vector<16x128xf32>
    %5 = arith.addf %4, %3 : vector<16x128xf32>
    %6 = arith.mulf %5, %5 : vector<16x128xf32>
    %cst_2 = arith.constant 1.000000e+00 : f32
    %7 = vector.broadcast %cst_2 : f32 to vector<16x128xf32>
    %8 = arith.addf %6, %7 : vector<16x128xf32>
    %9 = tpu.reciprocal %8 {approx = true} : vector<16x128xf32> -> vector<16x128xf32>
    %10 = arith.mulf %8, %9 : vector<16x128xf32>
    %cst_3 = arith.constant 2.000000e+00 : f32
    %11 = vector.broadcast %cst_3 : f32 to vector<16x128xf32>
    %12 = arith.subf %11, %10 : vector<16x128xf32>
    %13 = arith.mulf %9, %12 : vector<16x128xf32>
    %cst_4 = arith.constant 1.000000e+00 : f32
    %14 = vector.broadcast %cst_4 : f32 to vector<16x128xf32>
    %15 = arith.subf %6, %14 : vector<16x128xf32>
    %16 = arith.mulf %15, %13 : vector<16x128xf32>
    %cst_5 = arith.constant 2.000000e+01 : f32
    %17 = vector.broadcast %cst_5 : f32 to vector<16x128xf32>
    %18 = arith.cmpf ogt, %0, %17 : vector<16x128xf32>
    %19 = arith.mulf %0, %16 : vector<16x128xf32>
    %20 = arith.select %18, %0, %19 : vector<16x128xi1>, vector<16x128xf32>
    %c0_6 = arith.constant 0 : index
    %c0_7 = arith.constant 0 : index
    %21 = vector.load %arg2[%c0_6, %c0_7] : memref<16x128xf32, #tpu.memory_space<vmem>>, vector<16x128xf32>
    tpu.vector_store %arg2[%c0_6, %c0_7], %20 {strides = array<i32>} : memref<16x128xf32, #tpu.memory_space<vmem>>, vector<16x128xf32>,
    return
  }
  func.func @transform_0(%arg0: i32) -> (i32, i32) {
    %c0_i32 = arith.constant 0 : i32
    %c0_i32_0 = arith.constant 0 : i32
    return %arg0, %c0_i32 : i32, i32
  }
  func.func @transform_1(%arg0: i32) -> (i32, i32) {
    %c0_i32 = arith.constant 0 : i32
    %c0_i32_0 = arith.constant 0 : i32
    return %arg0, %c0_i32 : i32, i32
  }
}

</mosaic_0001>

<llo_original>
// kernel: tpu_custom_call.1
$region0: #{tpu_custom_call.1}
  #allocation0 [shape = 'u32[]', space=smem, size = 0x4, offset = 0x4, fixed_abs, tag = 'smem constant byte address 0x4 - core index']
  #allocation1 [shape = 'u32[144,128]{1,0:T(1,128)}', space=vmem, size = 0x12000, scoped, tag = 'internal scratch']
  %s0 = inlined_call_operand.hbm [shape: f32[128,128], index: 0, kind: input, shape index: {}]
  %s1 = inlined_call_operand.hbm [shape: f32[128,128], index: 1, kind: output, shape index: {}]
  %s2 = sld [smem:[#allocation0]]
  $region41: #{tpu_custom_call.1} parent=0
    _
  %s4 = ssub.s32 1, %s2
  %s5 = scalar_select 0, %s4, %s2
  $region1: #{tpu_custom_call.1} parent=0
    #allocation2 [shape = 'u8[16384]{0}', space=vmem, size = 0x4000, scoped, tag = 'input window, operand 0']
    #allocation3 [shape = 's32[2]{0}', space=sflag, size = 0x8, scoped, tag = 'scoped memory for tpu_custom_call.1']
    #allocation4 [shape = 's32[2]{0}', space=sflag, size = 0x8, scoped, tag = 'scoped memory for tpu_custom_call.1']
    #allocation5 [shape = 'u8[16384]{0}', space=vmem, size = 0x4000, scoped, tag = 'output window, operand 0']
    %6 = vsyncpa [#allocation3], 0
    %s7 = scalar_lea.sflag [#allocation3], 1
    %8 = vsyncpa %s7, 0
    %9 = vsyncpa [#allocation4], 0
    %s10 = scalar_lea.sflag [#allocation4], 1
    %11 = vsyncpa %s10, 0
    loop: start=0, step=1, limit=10
    $region2: #{tpu_custom_call.1} parent=1 // loop_pre_header
      _
    $region3: #{tpu_custom_call.1} parent=1 // loop_header
      %s13 = sphi 0, %s17
      %p14 = scmp.ge.s32.totalorder %s13, 10
      %s23 = sphi 0, %s25
      %s26 = sphi 0, %s23
      %s27 = sphi 0, %s26
      %s43 = sphi 0, %s27
      %s49 = sphi 0, %s51
      %s52 = sphi 0, %s49
      %s53 = sphi 0, %s52
      %s69 = sphi 0, %s53
    $region4: #{tpu_custom_call.1} parent=1 // loop_header_branch
      %16 = sbr.rel (%p14) target = $region8
    $region5: #{tpu_custom_call.1} parent=1 // loop_body
      %s18 = ssub.s32 %s13, 1
      %s19 = ssub.s32 %s13, 2
      %s20 = sadd.s32 %s13, 1
      %s21 = ssub.s32 %s13, %s20
      %p22 = scmp.eq.s32.totalorder %s21, 0
      %s24 = sadd.s32 %s23, 1
      %s25 = scalar_select %p22, %s23, %s24
      %p28 = pneg %p22
      %p29 = scmp.eq.s32.totalorder %s13, 7
      %p30 = por %p28, %p29
      %p31 = scmp.ne.s32.totalorder %s23, %s26
      %p32 = scmp.eq.s32.totalorder %s13, 0
      %p33 = por %p31, %p32
      %p34 = scmp.ne.s32.totalorder %s23, %s26
      %p35 = scmp.eq.s32.totalorder %s18, 7
      %p36 = por %p34, %p35
      %p37 = scmp.ne.s32.totalorder %s26, %s27
      %p38 = scmp.eq.s32.totalorder %s18, 0
      %p39 = por %p37, %p38
      %p40 = scmp.ne.s32.totalorder %s26, %s27
      %p41 = scmp.eq.s32.totalorder %s19, 7
      %p42 = por %p40, %p41
      %p44 = scmp.ne.s32.totalorder %s27, %s43
      %p45 = scmp.eq.s32.totalorder %s19, 0
      %p46 = por %p44, %p45
      %s47 = ssub.s32 %s13, %s20
      %p48 = scmp.eq.s32.totalorder %s47, 0
      %s50 = sadd.s32 %s49, 1
      %s51 = scalar_select %p48, %s49, %s50
      %p54 = pneg %p48
      %p55 = scmp.eq.s32.totalorder %s13, 7
      %p56 = por %p54, %p55
      %p57 = scmp.ne.s32.totalorder %s49, %s52
      %p58 = scmp.eq.s32.totalorder %s13, 0
      %p59 = por %p57, %p58
      %p60 = scmp.ne.s32.totalorder %s49, %s52
      %p61 = scmp.eq.s32.totalorder %s18, 7
      %p62 = por %p60, %p61
      %p63 = scmp.ne.s32.totalorder %s52, %s53
      %p64 = scmp.eq.s32.totalorder %s18, 0
      %p65 = por %p63, %p64
      %p66 = scmp.ne.s32.totalorder %s52, %s53
      %p67 = scmp.eq.s32.totalorder %s19, 7
      %p68 = por %p66, %p67
      %p70 = scmp.ne.s32.totalorder %s53, %s69
      %p71 = scmp.eq.s32.totalorder %s19, 0
      %p72 = por %p70, %p71
      %p73 = scmp.le.s32.totalorder 1, %s13
      %p74 = scmp.lt.s32.totalorder %s13, 9
      %p75 = pnand %p73, %p74
      %p76 = pneg %p75
      // Predicated region
      $region9: #{tpu_custom_call.1} parent=5 // pred_check
        _
      $region10: #{tpu_custom_call.1} parent=5 // pred_check_branch
        %78 = sbr.rel (%p75) target = $region12
      $region11: #{tpu_custom_call.1} parent=5 // pred_region
        %s79 = ssub.s32 %s13, 1
      $region12: #{tpu_custom_call.1} parent=5 // pred_fallthru
        _
      %p80 = scmp.lt.s32.totalorder %s13, 8
      // Predicated region
      $region13: #{tpu_custom_call.1} parent=5 // pred_check
        %p81 = pneg %p80
      $region14: #{tpu_custom_call.1} parent=5 // pred_check_branch
        %83 = sbr.rel (%p81) target = $region16
      $region15: #{tpu_custom_call.1} parent=5 // pred_region
        // Predicated region
        $region17: #{tpu_custom_call.1} parent=15 // pred_check
          %p84 = pneg %p33
        $region18: #{tpu_custom_call.1} parent=15 // pred_check_branch
          %86 = sbr.rel (%p84) target = $region20
        $region19: #{tpu_custom_call.1} parent=15 // pred_region
          %s87 = sand.u32 %s23, 1
          %s88 = scalar_lea.sflag [#allocation3], %s87
          %s89 = sand.u32 %s23, 1
          %s90 = smul.addr %s89, 16
          %s91 = scalar_lea.vmem [#allocation2], %s90
          %s92 = smul.u32 2, %s13
          %s94 = ssub.s32 256, 256
          %95 = vsyncadd %s88, %s94
          %s96 = smul.addr %s92, 128
          %s97 = scalar_lea.hbm %s0, %s96
          %s98 = sshll.u32 %s91, 4
          %s99 = int_to_ptr.vmem [resolvable:$true] %s98
          %104 = dma.hbm_to_vmem [thread:$0]  %s97, 256, %s99, %s88, 128, 128, 8
        $region20: #{tpu_custom_call.1} parent=15 // pred_fallthru
          _
      $region16: #{tpu_custom_call.1} parent=5 // pred_fallthru
        _
      %p105 = scmp.le.s32.totalorder 1, %s13
      %p106 = scmp.lt.s32.totalorder %s13, 9
      %p107 = pnand %p105, %p106
      %p108 = pneg %p107
      // Predicated region
      $region21: #{tpu_custom_call.1} parent=5 // pred_check
        _
      $region22: #{tpu_custom_call.1} parent=5 // pred_check_branch
        %110 = sbr.rel (%p107) target = $region24
      $region23: #{tpu_custom_call.1} parent=5 // pred_region
        %s111 = ssub.s32 %s13, 1
        %s112 = sand.u32 %s26, 1
        %s113 = scalar_lea.sflag [#allocation3], %s112
        %s114 = sand.u32 %s26, 1
        %s115 = smul.addr %s114, 16
        %s116 = scalar_lea.vmem [#allocation2], %s115
        // Predicated region
        $region25: #{tpu_custom_call.1} parent=23 // pred_check
          %p117 = pneg %p39
        $region26: #{tpu_custom_call.1} parent=23 // pred_check_branch
          %119 = sbr.rel (%p117) target = $region28
        $region27: #{tpu_custom_call.1} parent=23 // pred_region
          %120 = dma.done %s113, 256
        $region28: #{tpu_custom_call.1} parent=23 // pred_fallthru
          _
        %s121 = sand.u32 %s26, 1
        %s122 = scalar_lea.sflag [#allocation3], %s121
        %s123 = sand.u32 %s26, 1
        %s124 = smul.addr %s123, 16
        %s125 = scalar_lea.vmem [#allocation2], %s124
        %p126 = pneg %p39
        %p127 = pneg %p36
        %p128 = pneg %p65
        %p129 = pneg %p62
        %s130 = sand.u32 %s52, 1
        %s131 = scalar_lea.sflag [#allocation4], %s130
        %s132 = sand.u32 %s52, 1
        %s133 = smul.addr %s132, 16
        %s134 = scalar_lea.vmem [#allocation5], %s133
        %s135 = smul.u32 2, %s18
        %s136 = smul.u32 2, %s18
        %v137 = vld [vmem:[%s116] sm:$0xff]
        %v138 = vld [vmem:[%s116 + $0x8] sm:$0xff]
        %v139 = vmin.f32 %v137, 20.0
        %v140 = vmin.f32 %v138, 20.0
        %v141 = vmul.f32 %v139, 1.442695
        %v142 = vpow.pop %v141
        %v143 = vmul.f32 %v140, 1.442695
        %v144 = vpow.pop %v143
        %v145 = vadd.f32 %v142, 1.0
        %v146 = vadd.f32 %v144, 1.0
        %v147 = vmul.f32 %v145, %v145
        %v148 = vmul.f32 %v146, %v146
        %v149 = vadd.f32 %v147, 1.0
        %v150 = vadd.f32 %v148, 1.0
        %v151 = vrcp.pop %v149
        %v152 = vrcp.pop %v150
        %v153 = vmul.f32 %v149, %v151
        %v154 = vmul.f32 %v150, %v152
        %v155 = vsub.f32 2.0, %v153
        %v156 = vsub.f32 2.0, %v154
        %v157 = vmul.f32 %v151, %v155
        %v158 = vmul.f32 %v152, %v156
        %v159 = vsub.f32 %v147, 1.0
        %v160 = vsub.f32 %v148, 1.0
        %v161 = vmul.f32 %v159, %v157
        %v162 = vmul.f32 %v160, %v158
        %vm163 = vcmp.gt.f32.partialorder %v137, 20.0
        %vm164 = vcmp.gt.f32.partialorder %v138, 20.0
        %v165 = vmul.f32 %v137, %v161
        %v166 = vmul.f32 %v138, %v162
        %v167 = vsel %vm163, %v137, %v165
        %v168 = vsel %vm164, %v138, %v166
        %169 = vst [vmem:[%s134] sm:$0xff] %v167
        %170 = vst [vmem:[%s134 + $0x8] sm:$0xff] %v168
        %s171 = sand.u32 %s52, 1
        %s172 = scalar_lea.sflag [#allocation4], %s171
        %s173 = sand.u32 %s52, 1
        %s174 = smul.addr %s173, 16
        %s175 = scalar_lea.vmem [#allocation5], %s174
        // Predicated region
        $region29: #{tpu_custom_call.1} parent=23 // pred_check
          %p176 = pneg %p62
        $region30: #{tpu_custom_call.1} parent=23 // pred_check_branch
          %178 = sbr.rel (%p176) target = $region32
        $region31: #{tpu_custom_call.1} parent=23 // pred_region
          %s179 = smul.u32 2, %s18
          %s181 = ssub.s32 256, 256
          %182 = vsyncadd %s172, %s181
          %s183 = smul.addr %s179, 128
          %s184 = scalar_lea.hbm %s1, %s183
          %s185 = sshll.u32 %s175, 4
          %s186 = int_to_ptr.vmem [resolvable:$true] %s185
          %191 = dma.vmem_to_hbm [thread:$0]  %s186, 256, %s184, %s172, 128, 128, 8
        $region32: #{tpu_custom_call.1} parent=23 // pred_fallthru
          _
      $region24: #{tpu_custom_call.1} parent=5 // pred_fallthru
        _
      %p192 = scmp.le.s32.totalorder 2, %s13
      // Predicated region
      $region33: #{tpu_custom_call.1} parent=5 // pred_check
        %p193 = pneg %p192
      $region34: #{tpu_custom_call.1} parent=5 // pred_check_branch
        %195 = sbr.rel (%p193) target = $region36
      $region35: #{tpu_custom_call.1} parent=5 // pred_region
        %s196 = ssub.s32 %s13, 2
        // Predicated region
        $region37: #{tpu_custom_call.1} parent=35 // pred_check
          %p197 = pneg %p68
        $region38: #{tpu_custom_call.1} parent=35 // pred_check_branch
          %199 = sbr.rel (%p197) target = $region40
        $region39: #{tpu_custom_call.1} parent=35 // pred_region
          %s200 = sand.u32 %s53, 1
          %s201 = scalar_lea.sflag [#allocation4], %s200
          %s202 = sand.u32 %s53, 1
          %s203 = smul.addr %s202, 16
          %s204 = scalar_lea.vmem [#allocation5], %s203
          %205 = dma.done %s201, 256
        $region40: #{tpu_custom_call.1} parent=35 // pred_fallthru
          _
      $region36: #{tpu_custom_call.1} parent=5 // pred_fallthru
        _
    $region6: #{tpu_custom_call.1} parent=1 // loop_footer
      %s17 = sadd.s32 1, %s13
    $region7: #{tpu_custom_call.1} parent=1 // loop_footer_branch
      %12 = sbr.rel target = $region3
    $region8: #{tpu_custom_call.1} parent=1 // loop_exit
      _
    %206 = vsyncpa [#allocation3], 1
    %s207 = scalar_lea.sflag [#allocation3], 1
    %208 = vsyncpa %s207, 1
    %209 = vsyncpa [#allocation4], 1
    %s210 = scalar_lea.sflag [#allocation4], 1
    %211 = vsyncpa %s210, 1

</llo_original>
